<compile_context>
chip_gen: v6e
topology: v6e:2x2x1
jax: 0.10.0
libtpu: 0.0.40
codegen_flags: <defaults>
</compile_context>

<pallas_src>
import jax
import jax.numpy as jnp
from jax.experimental import pallas as pl
from jax.experimental.pallas import tpu as pltpu


def _round_up(x, m):
    return ((x + m - 1) // m) * m


def _autoencoder_kernel(x_ref, we_ref, be_ref, wd_ref, bd_ref, o_ref):
    """One batch tile: encoder matmul -> bias+ReLU (f32) -> decoder matmul -> bias."""
    # Encoder: [TM, D] bf16 @ [D, H] bf16 -> f32 accumulate on the MXU.
    h = jnp.dot(x_ref[...], we_ref[...], preferred_element_type=jnp.float32)
    h = jnp.maximum(h + be_ref[...], 0.0)            # f32 epilogue on the VPU
    # Decoder: cast activations to bf16 for the MXU, accumulate in f32.
    y = jnp.dot(h.astype(wd_ref.dtype), wd_ref[...],
                preferred_element_type=jnp.float32)
    o_ref[...] = (y + bd_ref[...]).astype(o_ref.dtype)


def autoencoder_forward(x, w_enc, b_enc, w_dec, b_dec, *, tm_max=256):
    """decoder(relu(encoder(x))) as one batch-tiled Pallas TPU kernel.

    x:     [B, D]  float32
    w_enc: [D, H]  float32   (PyTorch Linear weight [H, D], transposed)
    b_enc: [1, H]  float32
    w_dec: [H, D]  float32   (PyTorch Linear weight [D, H], transposed)
    b_dec: [1, D]  float32
    """
    B, D = x.shape
    H = w_enc.shape[1]
    assert w_enc.shape == (D, H) and w_dec.shape == (H, D)
    assert b_enc.shape == (1, H) and b_dec.shape == (1, D)
    out_dtype = x.dtype

    # bf16 MXU path; biases / epilogue stay f32.
    x_bf = x.astype(jnp.bfloat16)
    we_bf = w_enc.astype(jnp.bfloat16)
    wd_bf = w_dec.astype(jnp.bfloat16)
    be_f32 = b_enc.astype(jnp.float32)
    bd_f32 = b_dec.astype(jnp.float32)

    # Batch tile: multiple of 16 sublanes (bf16 packing), capped at tm_max.
    tm = min(tm_max, _round_up(B, 16))
    b_pad = _round_up(B, tm)
    if b_pad != B:
        x_bf = jnp.pad(x_bf, ((0, b_pad - B), (0, 0)))
    num_tiles = b_pad // tm

    # VMEM budget: resident bf16 weights + f32 biases + double-buffered x/out
    # tiles + f32 intermediates. Cap at 48 MiB (safe for v7x's 64 MiB VMEM).
    # TODO(synk): for very large D/H (weights > ~40 MiB) add a K-reduction grid
    # axis with an f32 accumulator instead of keeping weights fully resident.
    bytes_resident = (D * H + H * D) * 2 + (H + D) * 4
    bytes_stream = 2 * (tm * D * 2) + 2 * (tm * D * 4)      # x and out, 2x buffered
    bytes_interm = tm * H * 4 + tm * D * 4
    vmem_needed = bytes_resident + bytes_stream + bytes_interm
    vmem_limit = int(min(max(2 * vmem_needed, 32 << 20), 48 << 20))

    cost = pl.CostEstimate(
        flops=4 * B * D * H,                                # two matmuls
        transcendentals=0,
        bytes_accessed=(b_pad * D * 2                       # x (bf16)
                        + 2 * D * H * 2                     # both weights (bf16)
                        + (H + D) * 4                       # biases (f32)
                        + b_pad * D * 4),                   # output (f32)
    )

    out = pl.pallas_call(
        _autoencoder_kernel,
        out_shape=jax.ShapeDtypeStruct((b_pad, D), out_dtype),
        grid=(num_tiles,),
        in_specs=[
            pl.BlockSpec((tm, D), lambda i: (i, 0)),        # x: streamed per tile
            pl.BlockSpec((D, H), lambda i: (0, 0)),         # w_enc: resident
            pl.BlockSpec((1, H), lambda i: (0, 0)),         # b_enc: resident
            pl.BlockSpec((H, D), lambda i: (0, 0)),         # w_dec: resident
            pl.BlockSpec((1, D), lambda i: (0, 0)),         # b_dec: resident
        ],
        out_specs=pl.BlockSpec((tm, D), lambda i: (i, 0)),
        compiler_params=pltpu.CompilerParams(
            dimension_semantics=("parallel",),              # megacore on v7x
            vmem_limit_bytes=vmem_limit,
        ),
        cost_estimate=cost,
    )(x_bf, we_bf, be_f32, wd_bf, bd_f32)

    return out[:B] if b_pad != B else out


def init_params(key, d_in, d_hidden):
    """Deterministic init mimicking PyTorch nn.Linear default U(-1/sqrt(fan_in), +)."""
    k1, k2, k3, k4 = jax.random.split(key, 4)
    bound_e = 1.0 / (d_in ** 0.5)
    bound_d = 1.0 / (d_hidden ** 0.5)
    w_enc = jax.random.uniform(k1, (d_in, d_hidden), jnp.float32, -bound_e, bound_e)
    b_enc = jax.random.uniform(k2, (1, d_hidden), jnp.float32, -bound_e, bound_e)
    w_dec = jax.random.uniform(k3, (d_hidden, d_in), jnp.float32, -bound_d, bound_d)
    b_dec = jax.random.uniform(k4, (1, d_in), jnp.float32, -bound_d, bound_d)
    return w_enc, b_enc, w_dec, b_dec


def reference_forward(x, w_enc, b_enc, w_dec, b_dec):
    """Pure-JAX reference with the same bf16-matmul / f32-accumulate recipe."""
    xb = x.astype(jnp.bfloat16)
    web = w_enc.astype(jnp.bfloat16)
    wdb = w_dec.astype(jnp.bfloat16)
    h = jnp.maximum(
        jnp.dot(xb, web, preferred_element_type=jnp.float32) + b_enc, 0.0)
    y = jnp.dot(h.astype(jnp.bfloat16), wdb,
                preferred_element_type=jnp.float32) + b_dec
    return y.astype(x.dtype)


if __name__ == "__main__":
    B, D_IN, D_HID = 8, 256, 128   # small, lane/sublane-aligned demo shapes

    key = jax.random.PRNGKey(0)
    kx, kp = jax.random.split(key)
    x = jax.random.normal(kx, (B, D_IN), jnp.float32)
    w_enc, b_enc, w_dec, b_dec = init_params(kp, D_IN, D_HID)

    out = autoencoder_forward(x, w_enc, b_enc, w_dec, b_dec)
    out = jax.block_until_ready(out)

    ref = reference_forward(x, w_enc, b_enc, w_dec, b_dec)
    assert out.shape == (B, D_IN)
    assert jnp.allclose(out, ref, atol=1e-2, rtol=1e-2), "mismatch vs reference"

    print("KERNEL_OK")
</pallas_src>

<mosaic_0001>
module attributes {stable_mosaic.version = 11 : i64} {
  func.func @_autoencoder_kernel(%arg0: i32, %arg1: memref<16x256xbf16, #tpu.memory_space<vmem>>, %arg2: memref<256x128xbf16, #tpu.memory_space<vmem>>, %arg3: memref<1x128xf32, #tpu.memory_space<vmem>>, %arg4: memref<128x256xbf16, #tpu.memory_space<vmem>>, %arg5: memref<1x256xf32, #tpu.memory_space<vmem>>, %arg6: memref<16x256xf32, #tpu.memory_space<vmem>>) attributes {dimension_semantics = [#tpu.dimension_semantics<parallel>], iteration_bounds = array<i64: 1>, scalar_prefetch = 0 : i64, scratch_operands = 0 : i64, tpu.core_type = #tpu.core_type<tc>, window_params = [{transform_indices = @transform_0, window_bounds = array<i64: 16, 256>}, {pipeline_mode = #tpu.pipeline_mode<synchronous>, transform_indices = @transform_1, window_bounds = array<i64: 256, 128>}, {pipeline_mode = #tpu.pipeline_mode<synchronous>, transform_indices = @transform_2, window_bounds = array<i64: 1, 128>}, {pipeline_mode = #tpu.pipeline_mode<synchronous>, transform_indices = @transform_3, window_bounds = array<i64: 128, 256>}, {pipeline_mode = #tpu.pipeline_mode<synchronous>, transform_indices = @transform_4, window_bounds = array<i64: 1, 256>}, {transform_indices = @transform_5, window_bounds = array<i64: 16, 256>}]} {
    %c0 = arith.constant 0 : index
    %c0_0 = arith.constant 0 : index
    %0 = vector.load %arg1[%c0, %c0_0] : memref<16x256xbf16, #tpu.memory_space<vmem>>, vector<16x256xbf16>
    %c0_1 = arith.constant 0 : index
    %c0_2 = arith.constant 0 : index
    %1 = vector.load %arg2[%c0_1, %c0_2] : memref<256x128xbf16, #tpu.memory_space<vmem>>, vector<256x128xbf16>
    %cst = arith.constant dense<0.000000e+00> : vector<16x128xf32>
    %2 = tpu.matmul %0, %1, %cst {dimension_numbers = #tpu.dot_dimension_numbers<[1], [0], [0], [1], [0, 0, 1, 1], [], []>} : vector<16x256xbf16>, vector<256x128xbf16>, vector<16x128xf32> -> vector<16x128xf32>
    %c0_3 = arith.constant 0 : index
    %c0_4 = arith.constant 0 : index
    %3 = vector.load %arg3[%c0_3, %c0_4] : memref<1x128xf32, #tpu.memory_space<vmem>>, vector<1x128xf32>
    %4 = vector.broadcast %3 : vector<1x128xf32> to vector<16x128xf32>
    %5 = arith.addf %2, %4 : vector<16x128xf32>
    %cst_5 = arith.constant 0.000000e+00 : f32
    %6 = vector.broadcast %cst_5 : f32 to vector<16x128xf32>
    %7 = arith.maximumf %5, %6 : vector<16x128xf32>
    %8 = arith.truncf %7 : vector<16x128xf32> to vector<16x128xbf16>
    %c0_6 = arith.constant 0 : index
    %c0_7 = arith.constant 0 : index
    %9 = vector.load %arg4[%c0_6, %c0_7] : memref<128x256xbf16, #tpu.memory_space<vmem>>, vector<128x256xbf16>
    %cst_8 = arith.constant dense<0.000000e+00> : vector<16x256xf32>
    %10 = tpu.matmul %8, %9, %cst_8 {dimension_numbers = #tpu.dot_dimension_numbers<[1], [0], [0], [1], [0, 0, 1, 1], [], []>} : vector<16x128xbf16>, vector<128x256xbf16>, vector<16x256xf32> -> vector<16x256xf32>
    %c0_9 = arith.constant 0 : index
    %c0_10 = arith.constant 0 : index
    %11 = vector.load %arg5[%c0_9, %c0_10] : memref<1x256xf32, #tpu.memory_space<vmem>>, vector<1x256xf32>
    %12 = vector.broadcast %11 : vector<1x256xf32> to vector<16x256xf32>
    %13 = arith.addf %10, %12 : vector<16x256xf32>
    %c0_11 = arith.constant 0 : index
    %c0_12 = arith.constant 0 : index
    %14 = vector.load %arg6[%c0_11, %c0_12] : memref<16x256xf32, #tpu.memory_space<vmem>>, vector<16x256xf32>
    tpu.vector_store %arg6[%c0_11, %c0_12], %13 {strides = array<i32>} : memref<16x256xf32, #tpu.memory_space<vmem>>, vector<16x256xf32>,
    return
  }
  func.func @transform_0(%arg0: i32) -> (i32, i32) {
    %c0_i32 = arith.constant 0 : i32
    %c0_i32_0 = arith.constant 0 : i32
    return %arg0, %c0_i32 : i32, i32
  }
  func.func @transform_1(%arg0: i32) -> (i32, i32) {
    %c0_i32 = arith.constant 0 : i32
    %c0_i32_0 = arith.constant 0 : i32
    %c0_i32_1 = arith.constant 0 : i32
    return %c0_i32, %c0_i32_0 : i32, i32
  }
  func.func @transform_2(%arg0: i32) -> (i32, i32) {
    %c0_i32 = arith.constant 0 : i32
    %c0_i32_0 = arith.constant 0 : i32
    %c0_i32_1 = arith.constant 0 : i32
    return %c0_i32, %c0_i32_0 : i32, i32
  }
  func.func @transform_3(%arg0: i32) -> (i32, i32) {
    %c0_i32 = arith.constant 0 : i32
    %c0_i32_0 = arith.constant 0 : i32
    %c0_i32_1 = arith.constant 0 : i32
    return %c0_i32, %c0_i32_0 : i32, i32
  }
  func.func @transform_4(%arg0: i32) -> (i32, i32) {
    %c0_i32 = arith.constant 0 : i32
    %c0_i32_0 = arith.constant 0 : i32
    %c0_i32_1 = arith.constant 0 : i32
    return %c0_i32, %c0_i32_0 : i32, i32
  }
  func.func @transform_5(%arg0: i32) -> (i32, i32) {
    %c0_i32 = arith.constant 0 : i32
    %c0_i32_0 = arith.constant 0 : i32
    return %arg0, %c0_i32 : i32, i32
  }
}

</mosaic_0001>

<llo_original>
// kernel: tpu_custom_call.1
$region0: #{tpu_custom_call.1}
  #allocation0 [shape = 'u32[]', space=smem, size = 0x4, offset = 0x4, fixed_abs, tag = 'smem constant byte address 0x4 - core index']
  #allocation1 [shape = 'u32[144,128]{1,0:T(1,128)}', space=vmem, size = 0x12000, scoped, tag = 'internal scratch']
  %s0 = inlined_call_operand.hbm [shape: bf16[16,256], index: 0, kind: input, shape index: {}]
  %s1 = inlined_call_operand.hbm [shape: bf16[256,128], index: 1, kind: input, shape index: {}]
  %s2 = inlined_call_operand.vmem [shape: f32[1,128], index: 2, kind: input, shape index: {}]
  %s3 = inlined_call_operand.hbm [shape: bf16[128,256], index: 3, kind: input, shape index: {}]
  %s4 = inlined_call_operand.vmem [shape: f32[1,256], index: 4, kind: input, shape index: {}]
  %s5 = inlined_call_operand.hbm [shape: f32[16,256], index: 5, kind: output, shape index: {}]
  %s6 = sld [smem:[#allocation0]]
  $region42: #{tpu_custom_call.1} parent=0
    _
  %s8 = ssub.s32 1, %s6
  %s9 = scalar_select 0, %s8, %s6
  $region1: #{tpu_custom_call.1} parent=0
    #allocation2 [shape = 'u8[8192]{0}', space=vmem, size = 0x2000, scoped, tag = 'input window, operand 0, single buffered']
    #allocation3 [shape = 's32[1]{0}', space=sflag, size = 0x4, scoped, tag = 'scoped memory for tpu_custom_call.1']
    #allocation4 [shape = 's32[1]{0}', space=sflag, size = 0x4, scoped, tag = 'scoped memory for tpu_custom_call.1']
    #allocation5 [shape = 'u8[65536]{0}', space=vmem, size = 0x10000, scoped, tag = 'input window, operand 1, single buffered']
    #allocation6 [shape = 's32[1]{0}', space=sflag, size = 0x4, scoped, tag = 'scoped memory for tpu_custom_call.1']
    #allocation7 [shape = 'u8[65536]{0}', space=vmem, size = 0x10000, scoped, tag = 'input window, operand 3, single buffered']
    #allocation8 [shape = 'u8[16384]{0}', space=vmem, size = 0x4000, scoped, tag = 'output window, operand 0, single buffered']
    %10 = vsyncpa [#allocation3], 0
    %11 = vsyncpa [#allocation6], 0
    %12 = vsyncpa [#allocation4], 0
    // Predicated region
    $region2: #{tpu_custom_call.1} parent=1 // pred_check
      _
    $region3: #{tpu_custom_call.1} parent=1 // pred_check_branch
      %14 = sbr.rel (0) target = $region5
    $region4: #{tpu_custom_call.1} parent=1 // pred_region
      %s16 = ssub.s32 256, 256
      %17 = vsyncadd [#allocation3], %s16
      %s18 = sshll.u32 [#allocation2], 4
      %s19 = int_to_ptr.vmem [resolvable:$true] %s18
      %24 = dma.hbm_to_vmem [thread:$0]  %s0, 256, %s19, [#allocation3], 128, 128, 8
    $region5: #{tpu_custom_call.1} parent=1 // pred_fallthru
      _
    // Predicated region
    $region6: #{tpu_custom_call.1} parent=1 // pred_check
      _
    $region7: #{tpu_custom_call.1} parent=1 // pred_check_branch
      %26 = sbr.rel (0) target = $region9
    $region8: #{tpu_custom_call.1} parent=1 // pred_region
      %s28 = ssub.s32 2048, 2048
      %29 = vsyncadd [#allocation6], %s28
      %s30 = sshll.u32 [#allocation5], 4
      %s31 = int_to_ptr.vmem [resolvable:$true] %s30
      %36 = dma.hbm_to_vmem [thread:$0]  %s1, 2048, %s31, [#allocation6], 64, 64, 4
    $region9: #{tpu_custom_call.1} parent=1 // pred_fallthru
      _
    // Predicated region
    $region10: #{tpu_custom_call.1} parent=1 // pred_check
      _
    $region11: #{tpu_custom_call.1} parent=1 // pred_check_branch
      %38 = sbr.rel (0) target = $region13
    $region12: #{tpu_custom_call.1} parent=1 // pred_region
      _
    $region13: #{tpu_custom_call.1} parent=1 // pred_fallthru
      _
    // Predicated region
    $region14: #{tpu_custom_call.1} parent=1 // pred_check
      _
    $region15: #{tpu_custom_call.1} parent=1 // pred_check_branch
      %40 = sbr.rel (0) target = $region17
    $region16: #{tpu_custom_call.1} parent=1 // pred_region
      %s42 = ssub.s32 2048, 2048
      %43 = vsyncadd [#allocation6], %s42
      %s44 = sshll.u32 [#allocation7], 4
      %s45 = int_to_ptr.vmem [resolvable:$true] %s44
      %50 = dma.hbm_to_vmem [thread:$0]  %s3, 2048, %s45, [#allocation6], 128, 128, 8
    $region17: #{tpu_custom_call.1} parent=1 // pred_fallthru
      _
    // Predicated region
    $region18: #{tpu_custom_call.1} parent=1 // pred_check
      _
    $region19: #{tpu_custom_call.1} parent=1 // pred_check_branch
      %52 = sbr.rel (0) target = $region21
    $region20: #{tpu_custom_call.1} parent=1 // pred_region
      _
    $region21: #{tpu_custom_call.1} parent=1 // pred_fallthru
      _
    // Predicated region
    $region22: #{tpu_custom_call.1} parent=1 // pred_check
      _
    $region23: #{tpu_custom_call.1} parent=1 // pred_check_branch
      %54 = sbr.rel (0) target = $region25
    $region24: #{tpu_custom_call.1} parent=1 // pred_region
      %55 = dma.done [#allocation3], 256
    $region25: #{tpu_custom_call.1} parent=1 // pred_fallthru
      _
    // Predicated region
    $region26: #{tpu_custom_call.1} parent=1 // pred_check
      _
    $region27: #{tpu_custom_call.1} parent=1 // pred_check_branch
      %57 = sbr.rel (0) target = $region29
    $region28: #{tpu_custom_call.1} parent=1 // pred_region
      %58 = dma.done [#allocation6], 2048
    $region29: #{tpu_custom_call.1} parent=1 // pred_fallthru
      _
    // Predicated region
    $region30: #{tpu_custom_call.1} parent=1 // pred_check
      _
    $region31: #{tpu_custom_call.1} parent=1 // pred_check_branch
      %60 = sbr.rel (0) target = $region33
    $region32: #{tpu_custom_call.1} parent=1 // pred_region
      %61 = dma.done [#allocation6], 2048
    $region33: #{tpu_custom_call.1} parent=1 // pred_fallthru
      _
    %v63 = vld [vmem:[#allocation2] sm:$0xff]
    %v64 = vld [vmem:[#allocation2 + $0x8] sm:$0xff]
    %v65 = vld [vmem:[#allocation5] sm:$0xf]
    %v66 = vld [vmem:[#allocation5 + $0x4] sm:$0xf]
    %v67 = vld [vmem:[#allocation5 + $0x8] sm:$0xf]
    %v68 = vld [vmem:[#allocation5 + $0xc] sm:$0xf]
    %v69 = vld [vmem:[#allocation5 + $0x10] sm:$0xf]
    %v70 = vld [vmem:[#allocation5 + $0x14] sm:$0xf]
    %v71 = vld [vmem:[#allocation5 + $0x18] sm:$0xf]
    %v72 = vld [vmem:[#allocation5 + $0x1c] sm:$0xf]
    %v73 = vld [vmem:[#allocation5 + $0x20] sm:$0xf]
    %v74 = vld [vmem:[#allocation5 + $0x24] sm:$0xf]
    %v75 = vld [vmem:[#allocation5 + $0x28] sm:$0xf]
    %v76 = vld [vmem:[#allocation5 + $0x2c] sm:$0xf]
    %v77 = vld [vmem:[#allocation5 + $0x30] sm:$0xf]
    %v78 = vld [vmem:[#allocation5 + $0x34] sm:$0xf]
    %v79 = vld [vmem:[#allocation5 + $0x38] sm:$0xf]
    %v80 = vld [vmem:[#allocation5 + $0x3c] sm:$0xf]
    %v81 = vld [vmem:[#allocation5 + $0x40] sm:$0xf]
    %v82 = vld [vmem:[#allocation5 + $0x44] sm:$0xf]
    %v83 = vld [vmem:[#allocation5 + $0x48] sm:$0xf]
    %v84 = vld [vmem:[#allocation5 + $0x4c] sm:$0xf]
    %v85 = vld [vmem:[#allocation5 + $0x50] sm:$0xf]
    %v86 = vld [vmem:[#allocation5 + $0x54] sm:$0xf]
    %v87 = vld [vmem:[#allocation5 + $0x58] sm:$0xf]
    %v88 = vld [vmem:[#allocation5 + $0x5c] sm:$0xf]
    %v89 = vld [vmem:[#allocation5 + $0x60] sm:$0xf]
    %v90 = vld [vmem:[#allocation5 + $0x64] sm:$0xf]
    %v91 = vld [vmem:[#allocation5 + $0x68] sm:$0xf]
    %v92 = vld [vmem:[#allocation5 + $0x6c] sm:$0xf]
    %v93 = vld [vmem:[#allocation5 + $0x70] sm:$0xf]
    %v94 = vld [vmem:[#allocation5 + $0x74] sm:$0xf]
    %v95 = vld [vmem:[#allocation5 + $0x78] sm:$0xf]
    %v96 = vld [vmem:[#allocation5 + $0x7c] sm:$0xf]
    %v97 = vld [vmem:[%s2] sm:$0x1]
    %v99 = vlaneseq
    %v100 = vshrl.u32 %v99, 7
    %v101 = vsub.s32 0, %v100
    %v102 = vrot.slane %v97, %v101
    %v106 = vunpack.c.l.b16 %v63
    %v107 = vunpack.c.h.b16 %v63
    %v108 = vunpack.c.l.b16 %v64
    %v109 = vunpack.c.h.b16 %v64
    %v110 = vpack.c.b16 %v108, %v106
    %v111 = vpack.c.b16 %v109, %v107
    %v146 = vunpack.c.l.b16 %v65
    %v147 = vunpack.c.l.b16 %v66
    %v148 = vunpack.c.l.b16 %v67
    %v149 = vunpack.c.l.b16 %v68
    %v150 = vunpack.c.l.b16 %v69
    %v151 = vunpack.c.l.b16 %v70
    %v152 = vunpack.c.l.b16 %v71
    %v153 = vunpack.c.l.b16 %v72
    %v154 = vunpack.c.l.b16 %v73
    %v155 = vunpack.c.l.b16 %v74
    %v156 = vunpack.c.l.b16 %v75
    %v157 = vunpack.c.l.b16 %v76
    %v158 = vunpack.c.l.b16 %v77
    %v159 = vunpack.c.l.b16 %v78
    %v160 = vunpack.c.l.b16 %v79
    %v161 = vunpack.c.l.b16 %v80
    %v162 = vunpack.c.l.b16 %v81
    %v163 = vunpack.c.l.b16 %v82
    %v164 = vunpack.c.l.b16 %v83
    %v165 = vunpack.c.l.b16 %v84
    %v166 = vunpack.c.l.b16 %v85
    %v167 = vunpack.c.l.b16 %v86
    %v168 = vunpack.c.l.b16 %v87
    %v169 = vunpack.c.l.b16 %v88
    %v170 = vunpack.c.l.b16 %v89
    %v171 = vunpack.c.l.b16 %v90
    %v172 = vunpack.c.l.b16 %v91
    %v173 = vunpack.c.l.b16 %v92
    %v174 = vunpack.c.l.b16 %v93
    %v175 = vunpack.c.l.b16 %v94
    %v176 = vunpack.c.l.b16 %v95
    %v177 = vunpack.c.l.b16 %v96
    %v178 = vpack.c.b16 %v147, %v146
    %v179 = vpack.c.b16 %v149, %v148
    %v180 = vpack.c.b16 %v151, %v150
    %v181 = vpack.c.b16 %v153, %v152
    %v182 = vpack.c.b16 %v155, %v154
    %v183 = vpack.c.b16 %v157, %v156
    %v184 = vpack.c.b16 %v159, %v158
    %v185 = vpack.c.b16 %v161, %v160
    %v186 = vpack.c.b16 %v163, %v162
    %v187 = vpack.c.b16 %v165, %v164
    %v188 = vpack.c.b16 %v167, %v166
    %v189 = vpack.c.b16 %v169, %v168
    %v190 = vpack.c.b16 %v171, %v170
    %v191 = vpack.c.b16 %v173, %v172
    %v192 = vpack.c.b16 %v175, %v174
    %v193 = vpack.c.b16 %v177, %v176
    %210 = vmatprep.subr.bf16.mxu0 0
    %211 = vmatpush1.bf16.msra.mxu0 %v185
    %212 = vmatprep.subr.bf16.mxu0 0
    %213 = vmatpush1.bf16.msra.mxu0 %v184
    %214 = vmatprep.subr.bf16.mxu0 0
    %215 = vmatpush1.bf16.msra.mxu0 %v183
    %216 = vmatprep.subr.bf16.mxu0 0
    %217 = vmatpush1.bf16.msra.mxu0 %v182
    %218 = vmatprep.subr.bf16.mxu0 0
    %219 = vmatpush1.bf16.msra.mxu0 %v181
    %220 = vmatprep.subr.bf16.mxu0 0
    %221 = vmatpush1.bf16.msra.mxu0 %v180
    %222 = vmatprep.subr.bf16.mxu0 0
    %223 = vmatpush1.bf16.msra.mxu0 %v179
    %224 = vmatprep.subr.bf16.mxu0 0
    %225 = vmatpush1.bf16.msra.mxu0 %v178
    %226 = vmatprep.subr.bf16.mxu0 0
    %227 = vmatpush2.bf16.msra.mxu0 %v193
    %228 = vmatprep.subr.bf16.mxu0 0
    %229 = vmatpush2.bf16.msra.mxu0 %v192
    %230 = vmatprep.subr.bf16.mxu0 0
    %231 = vmatpush2.bf16.msra.mxu0 %v191
    %232 = vmatprep.subr.bf16.mxu0 0
    %233 = vmatpush2.bf16.msra.mxu0 %v190
    %234 = vmatprep.subr.bf16.mxu0 0
    %235 = vmatpush2.bf16.msra.mxu0 %v189
    %236 = vmatprep.subr.bf16.mxu0 0
    %237 = vmatpush2.bf16.msra.mxu0 %v188
    %238 = vmatprep.subr.bf16.mxu0 0
    %239 = vmatpush2.bf16.msra.mxu0 %v187
    %240 = vmatprep.subr.bf16.mxu0 0
    %241 = vmatpush2.bf16.msra.mxu0 %v186
    %242 = vmatprep.mubr.bf16.mxu0 %v111
    %243 = vmatmul.mubr.bf16.gmra.mxu0 %v110
    %v244 = vpop.f32.mrf.mxu0
    %v245 = vadd.f32 %v102, %v244
    %v246 = vpop.f32.mrf.mxu0
    %v247 = vpop.f32.mrf.mxu0
    %v248 = vadd.f32 %v102, %v247
    %v249 = vpop.f32.mrf.mxu0
    %250 = vdwg.mxu0
    %v251 = vmax.f32 %v245, 0.0
    %v252 = vmax.f32 %v248, 0.0
    %v253 = vpack.c.bf16 %v252, %v251
    %v254 = vld [vmem:[#allocation7] sm:$0xff]
    %v255 = vld [vmem:[#allocation7 + $0x8] sm:$0xff]
    %v256 = vld [vmem:[#allocation7 + $0x10] sm:$0xff]
    %v257 = vld [vmem:[#allocation7 + $0x18] sm:$0xff]
    %v258 = vld [vmem:[#allocation7 + $0x20] sm:$0xff]
    %v259 = vld [vmem:[#allocation7 + $0x28] sm:$0xff]
    %v260 = vld [vmem:[#allocation7 + $0x30] sm:$0xff]
    %v261 = vld [vmem:[#allocation7 + $0x38] sm:$0xff]
    %v262 = vld [vmem:[#allocation7 + $0x40] sm:$0xff]
    %v263 = vld [vmem:[#allocation7 + $0x48] sm:$0xff]
    %v264 = vld [vmem:[#allocation7 + $0x50] sm:$0xff]
    %v265 = vld [vmem:[#allocation7 + $0x58] sm:$0xff]
    %v266 = vld [vmem:[#allocation7 + $0x60] sm:$0xff]
    %v267 = vld [vmem:[#allocation7 + $0x68] sm:$0xff]
    %v268 = vld [vmem:[#allocation7 + $0x70] sm:$0xff]
    %v269 = vld [vmem:[#allocation7 + $0x78] sm:$0xff]
    %v270 = vld [vmem:[%s4] sm:$0x3]
    %v272 = vlaneseq
    %v273 = vshrl.u32 %v272, 7
    %v274 = vsub.s32 0, %v273
    %v275 = vrot.slane %v270, %v274
    %v276 = vlaneseq
    %v277 = vshrl.u32 %v276, 7
    %v278 = vsub.s32 1, %v277
    %v279 = vrot.slane %v270, %v278
    %v298 = vunpack.c.l.b16 %v254
    %v299 = vunpack.c.h.b16 %v254
    %v300 = vunpack.c.l.b16 %v255
    %v301 = vunpack.c.h.b16 %v255
    %v302 = vunpack.c.l.b16 %v256
    %v303 = vunpack.c.h.b16 %v256
    %v304 = vunpack.c.l.b16 %v257
    %v305 = vunpack.c.h.b16 %v257
    %v306 = vunpack.c.l.b16 %v258
    %v307 = vunpack.c.h.b16 %v258
    %v308 = vunpack.c.l.b16 %v259
    %v309 = vunpack.c.h.b16 %v259
    %v310 = vunpack.c.l.b16 %v260
    %v311 = vunpack.c.h.b16 %v260
    %v312 = vunpack.c.l.b16 %v261
    %v313 = vunpack.c.h.b16 %v261
    %v314 = vunpack.c.l.b16 %v262
    %v315 = vunpack.c.h.b16 %v262
    %v316 = vunpack.c.l.b16 %v263
    %v317 = vunpack.c.h.b16 %v263
    %v318 = vunpack.c.l.b16 %v264
    %v319 = vunpack.c.h.b16 %v264
    %v320 = vunpack.c.l.b16 %v265
    %v321 = vunpack.c.h.b16 %v265
    %v322 = vunpack.c.l.b16 %v266
    %v323 = vunpack.c.h.b16 %v266
    %v324 = vunpack.c.l.b16 %v267
    %v325 = vunpack.c.h.b16 %v267
    %v326 = vunpack.c.l.b16 %v268
    %v327 = vunpack.c.h.b16 %v268
    %v328 = vunpack.c.l.b16 %v269
    %v329 = vunpack.c.h.b16 %v269
    %v330 = vpack.c.b16 %v300, %v298
    %v331 = vpack.c.b16 %v301, %v299
    %v332 = vpack.c.b16 %v304, %v302
    %v333 = vpack.c.b16 %v305, %v303
    %v334 = vpack.c.b16 %v308, %v306
    %v335 = vpack.c.b16 %v309, %v307
    %v336 = vpack.c.b16 %v312, %v310
    %v337 = vpack.c.b16 %v313, %v311
    %v338 = vpack.c.b16 %v316, %v314
    %v339 = vpack.c.b16 %v317, %v315
    %v340 = vpack.c.b16 %v320, %v318
    %v341 = vpack.c.b16 %v321, %v319
    %v342 = vpack.c.b16 %v324, %v322
    %v343 = vpack.c.b16 %v325, %v323
    %v344 = vpack.c.b16 %v328, %v326
    %v345 = vpack.c.b16 %v329, %v327
    %362 = vmatprep.subr.bf16.mxu0 %v345
    %363 = vmatpush1.bf16.msra.mxu0 %v344
    %364 = vmatprep.subr.bf16.mxu0 %v343
    %365 = vmatpush1.bf16.msra.mxu0 %v342
    %366 = vmatprep.subr.bf16.mxu0 %v341
    %367 = vmatpush1.bf16.msra.mxu0 %v340
    %368 = vmatprep.subr.bf16.mxu0 %v339
    %369 = vmatpush1.bf16.msra.mxu0 %v338
    %370 = vmatprep.subr.bf16.mxu0 %v337
    %371 = vmatpush1.bf16.msra.mxu0 %v336
    %372 = vmatprep.subr.bf16.mxu0 %v335
    %373 = vmatpush1.bf16.msra.mxu0 %v334
    %374 = vmatprep.subr.bf16.mxu0 %v333
    %375 = vmatpush1.bf16.msra.mxu0 %v332
    %376 = vmatprep.subr.bf16.mxu0 %v331
    %377 = vmatpush1.bf16.msra.mxu0 %v330
    %378 = vmatprep.subr.bf16.mxu0 0
    %379 = vmatpush2.bf16.msra.mxu0 0
    %380 = vmatprep.subr.bf16.mxu0 0
    %381 = vmatpush2.bf16.msra.mxu0 0
    %382 = vmatprep.subr.bf16.mxu0 0
    %383 = vmatpush2.bf16.msra.mxu0 0
    %384 = vmatprep.subr.bf16.mxu0 0
    %385 = vmatpush2.bf16.msra.mxu0 0
    %386 = vmatprep.subr.bf16.mxu0 0
    %387 = vmatpush2.bf16.msra.mxu0 0
    %388 = vmatprep.subr.bf16.mxu0 0
    %389 = vmatpush2.bf16.msra.mxu0 0
    %390 = vmatprep.subr.bf16.mxu0 0
    %391 = vmatpush2.bf16.msra.mxu0 0
    %392 = vmatprep.subr.bf16.mxu0 0
    %393 = vmatpush2.bf16.msra.mxu0 0
    %394 = vmatprep.mubr.bf16.mxu0 0
    %395 = vmatmul.mubr.bf16.gmra.mxu0 %v253
    %v396 = vpop.f32.mrf.mxu0
    %v397 = vadd.f32 %v275, %v396
    %v398 = vpop.f32.mrf.mxu0
    %v399 = vadd.f32 %v279, %v398
    %v400 = vpop.f32.mrf.mxu0
    %v401 = vadd.f32 %v275, %v400
    %v402 = vpop.f32.mrf.mxu0
    %v403 = vadd.f32 %v279, %v402
    %404 = vdwg.mxu0
    %405 = vst [vmem:[#allocation8] sm:$0xff] %v397
    %406 = vst [vmem:[#allocation8 + $0x8] sm:$0xff] %v399
    %407 = vst [vmem:[#allocation8 + $0x10] sm:$0xff] %v401
    %408 = vst [vmem:[#allocation8 + $0x18] sm:$0xff] %v403
    // Predicated region
    $region34: #{tpu_custom_call.1} parent=1 // pred_check
      _
    $region35: #{tpu_custom_call.1} parent=1 // pred_check_branch
      %410 = sbr.rel (0) target = $region37
    $region36: #{tpu_custom_call.1} parent=1 // pred_region
      %s412 = ssub.s32 512, 512
      %413 = vsyncadd [#allocation4], %s412
      %s414 = sshll.u32 [#allocation8], 4
      %s415 = int_to_ptr.vmem [resolvable:$true] %s414
      %420 = dma.vmem_to_hbm [thread:$0]  %s415, 512, %s5, [#allocation4], 256, 256, 16
    $region37: #{tpu_custom_call.1} parent=1 // pred_fallthru
      _
    // Predicated region
    $region38: #{tpu_custom_call.1} parent=1 // pred_check
      _
    $region39: #{tpu_custom_call.1} parent=1 // pred_check_branch
      %422 = sbr.rel (0) target = $region41
    $region40: #{tpu_custom_call.1} parent=1 // pred_region
      %423 = dma.done [#allocation4], 512
    $region41: #{tpu_custom_call.1} parent=1 // pred_fallthru
      _
    %424 = vsyncpa [#allocation3], 1
    %425 = vsyncpa [#allocation6], 1
    %426 = vsyncpa [#allocation4], 1

</llo_original>
